<compile_context>
chip_gen: v7x
topology: tpu7x:2x2x1
jax: 0.10.0
libtpu: 0.0.40
codegen_flags: <defaults>
</compile_context>

<pallas_src>
import jax
import jax.numpy as jnp
from jax.experimental import pallas as pl
from jax.experimental.pallas import tpu as pltpu

_LANES = 128


def _round_up(x: int, m: int) -> int:
    return ((x + m - 1) // m) * m


def _tpu_generation_params():
    """Returns (num_tensorcores, max_block_bytes, vmem_limit_bytes|None)."""
    try:
        kind = jax.devices()[0].device_kind.lower()
    except Exception:  # no devices / unusual backend -> conservative defaults
        kind = ""
    if "v7" in kind:
        # 2 TCs/chip, 64 MiB VMEM/TC, ~3.2 TB/s HBM: big blocks, even grid.
        return 2, 8 * 1024 * 1024, 48 * 1024 * 1024
    if "v6" in kind:
        # 1 TC, 128 MiB VMEM, ~1.4 TB/s HBM.
        return 1, 4 * 1024 * 1024, 48 * 1024 * 1024
    # v5e or unknown: 16 MiB scoped-VMEM default -> keep blocks <= 2 MiB.
    return 1, 2 * 1024 * 1024, None


def _pick_block_rows(rows: int, itemsize: int, max_block_bytes: int,
                     num_cores: int) -> int:
    """Block row count: as large as allowed (HBM roofline), packing-aligned,
    with an even >=2-step grid only on multi-TensorCore chips (v7x)."""
    # Sublane packing granularity: f32 -> 8, bf16/f16 -> 16, int8/fp8 -> 32.
    pack = 8 * max(1, 4 // itemsize)
    max_rows = max(pack, (max_block_bytes // (_LANES * itemsize)) // pack * pack)

    if num_cores <= 1:
        # Single TC: no benefit from splitting; one full-extent block if it fits.
        if rows <= max_rows:
            return rows
        return max_rows

    # Multi-TC (v7x): want at least 2 grid steps and an even grid length.
    if rows <= pack:
        return rows  # too small to split; single full-extent block
    half = -(-rows // 2)  # ceil(rows / 2)
    block_rows = min(max_rows, _round_up(half, pack))
    g = -(-rows // block_rows)
    if g > 1 and g % 2 == 1:
        # Shrink the block slightly so the grid length becomes even.
        cand = max(pack, _round_up(-(-rows // (g + 1)), pack))
        if (-(-rows // cand)) % 2 == 0:
            block_rows = cand
    return block_rows


def _mul_reciprocal_kernel(inv_scale_ref, x_ref, o_ref):
    # inv_scale_ref: SMEM (1,) f32 scalar; x_ref / o_ref: VMEM tiles.
    inv = inv_scale_ref[0]
    # Multiply in f32 (matches the module's float math), cast back to out dtype.
    o_ref[...] = (x_ref[...] * inv).astype(o_ref.dtype)


def _build_call(rows: int, block_rows: int, dtype, vmem_limit_bytes):
    grid = (pl.cdiv(rows, block_rows),)  # ragged last block is masked by Pallas
    cp_kwargs = dict(dimension_semantics=("parallel",))
    if vmem_limit_bytes is not None:
        cp_kwargs["vmem_limit_bytes"] = vmem_limit_bytes
    return pl.pallas_call(
        _mul_reciprocal_kernel,
        out_shape=jax.ShapeDtypeStruct((rows, _LANES), dtype),
        grid_spec=pltpu.PrefetchScalarGridSpec(
            num_scalar_prefetch=0,
            grid=grid,
            in_specs=[
                pl.BlockSpec(memory_space=pltpu.MemorySpace.SMEM),
                pl.BlockSpec((block_rows, _LANES), lambda i: (i, 0)),
            ],
            out_specs=pl.BlockSpec((block_rows, _LANES), lambda i: (i, 0)),
        ),
        compiler_params=pltpu.CompilerParams(**cp_kwargs),
    )


@jax.jit
def mul_reciprocal(x: jax.Array, scale: jax.Array) -> jax.Array:
    """Computes x * (1.0 / scale) with a Pallas TPU kernel."""
    orig_shape = x.shape
    itemsize = jnp.dtype(x.dtype).itemsize

    # inv_scale computed once (matches the module: inv_scale = 1.0 / scale).
    # TODO(synk): per-channel / broadcast `scale` is not supported (scalar only).
    inv_scale = (1.0 / jnp.asarray(scale, dtype=jnp.float32)).reshape(1)

    flat = x.reshape(-1)
    n = flat.shape[0]

    rem = n % _LANES
    if rem != 0:
        # Pad only to the next 128-lane boundary (<=127 elements).
        flat_in = jnp.pad(flat, (0, _LANES - rem))
    else:
        flat_in = flat  # zero-copy path (common case)

    rows = flat_in.shape[0] // _LANES
    x2d = flat_in.reshape(rows, _LANES)

    num_cores, max_block_bytes, vmem_limit_bytes = _tpu_generation_params()
    block_rows = _pick_block_rows(rows, itemsize, max_block_bytes, num_cores)

    out2d = _build_call(rows, block_rows, x2d.dtype, vmem_limit_bytes)(
        inv_scale, x2d)

    out = out2d.reshape(-1)
    if rem != 0:
        out = out[:n]
    return out.reshape(orig_shape)


if __name__ == "__main__":
    key = jax.random.PRNGKey(0)
    kx, _ = jax.random.split(key)

    # Small NCHW input consistent with the inductor int8 test.
    x = jax.random.normal(kx, (2, 4, 16, 16), dtype=jnp.float32)
    scale = jnp.float32(0.75)  # deterministic scalar scale

    out = jax.block_until_ready(mul_reciprocal(x, scale))

    # Reference check in plain JAX (same reciprocal-then-multiply semantics).
    ref = x * (1.0 / scale)
    assert out.shape == x.shape
    assert out.dtype == x.dtype
    assert jnp.allclose(out, ref, rtol=1e-6, atol=1e-6), "mismatch vs reference"

    print("KERNEL_OK")
</pallas_src>

<mosaic_0001>
module attributes {stable_mosaic.version = 11 : i64} {
  func.func @_mul_reciprocal_kernel(%arg0: i32, %arg1: memref<1xf32, #tpu.memory_space<smem>>, %arg2: memref<16x128xf32, #tpu.memory_space<vmem>>, %arg3: memref<16x128xf32, #tpu.memory_space<vmem>>) attributes {dimension_semantics = [#tpu.dimension_semantics<parallel>], iteration_bounds = array<i64: 1>, scalar_prefetch = 0 : i64, scratch_operands = 0 : i64, tpu.core_type = #tpu.core_type<tc>, window_params = [{transform_indices = @transform_0, window_bounds = array<i64: 1>}, {transform_indices = @transform_1, window_bounds = array<i64: 16, 128>}, {transform_indices = @transform_2, window_bounds = array<i64: 16, 128>}]} {
    %c0 = arith.constant 0 : index
    %0 = memref.load %arg1[%c0] : memref<1xf32, #tpu.memory_space<smem>>
    %c0_0 = arith.constant 0 : index
    %c0_1 = arith.constant 0 : index
    %1 = vector.load %arg2[%c0_0, %c0_1] : memref<16x128xf32, #tpu.memory_space<vmem>>, vector<16x128xf32>
    %2 = vector.broadcast %0 : f32 to vector<16x128xf32>
    %3 = arith.mulf %1, %2 : vector<16x128xf32>
    %c0_2 = arith.constant 0 : index
    %c0_3 = arith.constant 0 : index
    %4 = vector.load %arg3[%c0_2, %c0_3] : memref<16x128xf32, #tpu.memory_space<vmem>>, vector<16x128xf32>
    tpu.vector_store %arg3[%c0_2, %c0_3], %3 {strides = array<i32>} : memref<16x128xf32, #tpu.memory_space<vmem>>, vector<16x128xf32>,
    return
  }
  func.func @transform_0(%arg0: i32) -> i32 {
    %c0_i32 = arith.constant 0 : i32
    %c0_i32_0 = arith.constant 0 : i32
    return %c0_i32 : i32
  }
  func.func @transform_1(%arg0: i32) -> (i32, i32) {
    %c0_i32 = arith.constant 0 : i32
    %c0_i32_0 = arith.constant 0 : i32
    return %arg0, %c0_i32 : i32, i32
  }
  func.func @transform_2(%arg0: i32) -> (i32, i32) {
    %c0_i32 = arith.constant 0 : i32
    %c0_i32_0 = arith.constant 0 : i32
    return %arg0, %c0_i32 : i32, i32
  }
}

</mosaic_0001>

<llo_original>
// kernel: mul_reciprocal.1
$region0: #{mul_reciprocal.1}
  #allocation0 [shape = 'u32[]', space=smem, size = 0x4, offset = 0x4, fixed_abs, tag = 'smem constant byte address 0x4 - core index']
  #allocation1 [shape = 'u32[144,128]{1,0:T(1,128)}', space=vmem, size = 0x12000, scoped, tag = 'internal scratch']
  #allocation2 [shape = 'f32[1]{0:T(128)S(6)}', space=smem, size = 0x200, scoped, tag = 'scoped memory for mul_reciprocal.1']
  %s0 = inlined_call_operand.<no memory space> [shape: f32[1], index: 0, kind: input, shape index: {}]
  %s1 = inlined_call_operand.vmem [shape: f32[16,128], index: 1, kind: input, shape index: {}]
  %s2 = inlined_call_operand.vmem [shape: f32[16,128], index: 2, kind: output, shape index: {}]
  %s3 = sld [smem:[#allocation0]]
  $region18: #{mul_reciprocal.1} parent=0
    _
  %s5 = ssub.s32 1, %s3
  %s6 = scalar_select 0, %s5, %s3
  %7 = sst [smem:[#allocation2]] %s0
  // Predicated region
  $region2: #{mul_reciprocal.1} parent=0 // pred_check
    _
  $region3: #{mul_reciprocal.1} parent=0 // pred_check_branch
    %9 = sbr.rel (0) target = $region5
  $region4: #{mul_reciprocal.1} parent=0 // pred_region
    _
  $region5: #{mul_reciprocal.1} parent=0 // pred_fallthru
    _
  // Predicated region
  $region6: #{mul_reciprocal.1} parent=0 // pred_check
    _
  $region7: #{mul_reciprocal.1} parent=0 // pred_check_branch
    %11 = sbr.rel (0) target = $region9
  $region8: #{mul_reciprocal.1} parent=0 // pred_region
    _
  $region9: #{mul_reciprocal.1} parent=0 // pred_fallthru
    _
  %s12 = sld [smem:[#allocation2]]
  %v13 = vld [vmem:[%s1] sm:$0xff]
  %v14 = vld [vmem:[%s1 + $0x8] sm:$0xff]
  %v15 = vstv %s12
  %v16 = vmul.f32 %v13, %v15
  %v17 = vmul.f32 %v14, %v15
  %18 = vst [vmem:[%s2] sm:$0xff] %v16
  %19 = vst [vmem:[%s2 + $0x8] sm:$0xff] %v17
  // Predicated region
  $region10: #{mul_reciprocal.1} parent=0 // pred_check
    _
  $region11: #{mul_reciprocal.1} parent=0 // pred_check_branch
    %21 = sbr.rel (0) target = $region13
  $region12: #{mul_reciprocal.1} parent=0 // pred_region
    _
  $region13: #{mul_reciprocal.1} parent=0 // pred_fallthru
    _
  // Predicated region
  $region14: #{mul_reciprocal.1} parent=0 // pred_check
    _
  $region15: #{mul_reciprocal.1} parent=0 // pred_check_branch
    %23 = sbr.rel (0) target = $region17
  $region16: #{mul_reciprocal.1} parent=0 // pred_region
    _
  $region17: #{mul_reciprocal.1} parent=0 // pred_fallthru
    _

</llo_original>
